<compile_context>
chip_gen: v5e
topology: v5e:2x2
jax: 0.10.0
libtpu: 0.0.40
codegen_flags: <defaults>
</compile_context>

<pallas_src>
import functools
import math

import jax
import jax.numpy as jnp
from jax import lax
from jax.experimental import pallas as pl
from jax.experimental.pallas import tpu as pltpu


def _round8(v):
    return ((v + 7) // 8) * 8


# ---------------------------------------------------------------------------
# Pallas kernel 1: conv-as-GEMM with folded BatchNorm, optional fused residual
# add and optional ReLU.
#   out[m, o] = relu( x[m, :] @ w[:, o] * scale[o] + shift[o] (+ res[m, o]) )
# Inputs x / w are bf16 (MXU native path); accumulation and the epilogue run
# in f32; the output is stored bf16 to halve writeback traffic.
# ---------------------------------------------------------------------------
def _conv_gemm_kernel(x_ref, w_ref, scale_ref, shift_ref, *rest,
                      relu, has_residual):
    if has_residual:
        res_ref, o_ref = rest
    else:
        (o_ref,) = rest
    acc = jnp.dot(x_ref[...], w_ref[...], preferred_element_type=jnp.float32)
    acc = acc * scale_ref[...] + shift_ref[...]
    if has_residual:
        acc = acc + res_ref[...].astype(jnp.float32)
    if relu:
        acc = jnp.maximum(acc, 0.0)
    o_ref[...] = acc.astype(o_ref.dtype)


def pallas_gemm_bn(x, wmat, scale, shift, relu, residual=None,
                   out_dtype=jnp.bfloat16, tm_max=512):
    m, k = x.shape
    n = wmat.shape[1]
    tm = min(tm_max, _round8(m))          # adaptive tile; partial blocks OK
    grid = (pl.cdiv(m, tm),)
    in_specs = [
        pl.BlockSpec((tm, k), lambda i: (i, 0)),
        # TODO(synk): on v7x, single-buffer this grid-invariant weight block
        # (pipeline_mode=pl.Buffered(1)) to save VMEM within the 64 MiB budget.
        pl.BlockSpec((k, n), lambda i: (0, 0)),
        pl.BlockSpec((1, n), lambda i: (0, 0)),
        pl.BlockSpec((1, n), lambda i: (0, 0)),
    ]
    args = [x, wmat, scale.reshape(1, n), shift.reshape(1, n)]
    has_res = residual is not None
    if has_res:
        in_specs.append(pl.BlockSpec((tm, n), lambda i: (i, 0)))
        args.append(residual)
    return pl.pallas_call(
        functools.partial(_conv_gemm_kernel, relu=relu, has_residual=has_res),
        out_shape=jax.ShapeDtypeStruct((m, n), out_dtype),
        grid=grid,
        in_specs=in_specs,
        out_specs=pl.BlockSpec((tm, n), lambda i: (i, 0)),
        compiler_params=pltpu.CompilerParams(
            dimension_semantics=("parallel",),
            vmem_limit_bytes=48 * 1024 * 1024,
        ),
    )(*args)


def conv_bn(x, cp, relu, residual=None):
    """x: (N, H, W, C) bf16 NHWC. Conv + folded BN (+fused residual) (+ReLU)."""
    kh, kw, stride = cp['kh'], cp['kw'], cp['stride']
    if kh == 1 and kw == 1:
        # 1x1 conv: im2col is a no-op; stride handled by slicing.
        xs = x[:, ::stride, ::stride, :]
        nb, ho, wo, kdim = xs.shape
        pm = xs.reshape(nb * ho * wo, kdim)
    else:
        # TODO(synk): im2col is still materialized in HBM (bf16, NHWC, no
        # transposes); an in-kernel halo-DMA patch build would cut the 9x read
        # amplification further.
        patches = lax.conv_general_dilated_patches(
            x, filter_shape=(kh, kw), window_strides=(stride, stride),
            padding=[(cp['pad'], cp['pad']), (cp['pad'], cp['pad'])],
            dimension_numbers=('NHWC', 'HWIO', 'NHWC'))
        nb, ho, wo, kdim = patches.shape
        pm = patches.reshape(nb * ho * wo, kdim)
    kpad = cp['wmat'].shape[0]
    if kdim != kpad:                       # stem only: K = 147 -> 256
        pm = jnp.pad(pm, ((0, 0), (0, kpad - kdim)))
    res = None if residual is None else residual.reshape(nb * ho * wo, -1)
    out = pallas_gemm_bn(pm, cp['wmat'], cp['scale'], cp['shift'], relu,
                         residual=res)
    return out.reshape(nb, ho, wo, cp['wmat'].shape[1])


def basic_block(x, blk):
    idn = x if blk['down'] is None else conv_bn(x, blk['down'], relu=False)
    out = conv_bn(x, blk['conv1'], relu=True)
    # second conv: BN + residual add + ReLU all fused in the GEMM epilogue
    return conv_bn(out, blk['conv2'], relu=True, residual=idn)


# ---------------------------------------------------------------------------
# Pallas kernel 2a: flattened MIL head GEMMs over (B*P, 512).
#   feat = relu(x @ Wfc)              (Linear(512, F, bias=False) + relu)
#   v = tanh(feat @ Wv + bv); u = sigmoid(feat @ Wu + bu)
#   att = (u * v) @ Ww + bw           (B*P, 1) attention logits
# ---------------------------------------------------------------------------
def _mil_feat_kernel(x_ref, wfc_ref, wv_ref, bv_ref, wu_ref, bu_ref,
                     ww_ref, bw_ref, feat_ref, att_ref):
    feat = jnp.maximum(
        jnp.dot(x_ref[...], wfc_ref[...], preferred_element_type=jnp.float32),
        0.0)
    fb = feat.astype(jnp.bfloat16)
    v = jnp.tanh(jnp.dot(fb, wv_ref[...],
                         preferred_element_type=jnp.float32) + bv_ref[...])
    u = jax.nn.sigmoid(jnp.dot(fb, wu_ref[...],
                               preferred_element_type=jnp.float32) + bu_ref[...])
    att = jnp.dot((u * v).astype(jnp.bfloat16), ww_ref[...],
                  preferred_element_type=jnp.float32) + bw_ref[...]
    feat_ref[...] = feat
    att_ref[...] = att


def mil_feat(x, params, tm_max=256):
    m, cin = x.shape
    f = params['wfc'].shape[1]
    d = params['wv'].shape[1]
    tm = min(tm_max, _round8(m))
    grid = (pl.cdiv(m, tm),)
    feat, att = pl.pallas_call(
        _mil_feat_kernel,
        out_shape=(jax.ShapeDtypeStruct((m, f), jnp.float32),
                   jax.ShapeDtypeStruct((m, 1), jnp.float32)),
        grid=grid,
        in_specs=[
            pl.BlockSpec((tm, cin), lambda i: (i, 0)),
            pl.BlockSpec((cin, f), lambda i: (0, 0)),
            pl.BlockSpec((f, d), lambda i: (0, 0)),
            pl.BlockSpec((1, d), lambda i: (0, 0)),
            pl.BlockSpec((f, d), lambda i: (0, 0)),
            pl.BlockSpec((1, d), lambda i: (0, 0)),
            pl.BlockSpec((d, 1), lambda i: (0, 0)),
            pl.BlockSpec((1, 1), lambda i: (0, 0)),
        ],
        out_specs=(pl.BlockSpec((tm, f), lambda i: (i, 0)),
                   pl.BlockSpec((tm, 1), lambda i: (i, 0))),
        compiler_params=pltpu.CompilerParams(
            dimension_semantics=("parallel",),
            vmem_limit_bytes=48 * 1024 * 1024,
        ),
    )(x, params['wfc'], params['wv'], params['bv'],
      params['wu'], params['bu'], params['ww'], params['bw'])
    return feat, att


# ---------------------------------------------------------------------------
# Pallas kernel 2b: per-batch softmax over patches + weighted sum (== bmm).
# ---------------------------------------------------------------------------
def _mil_pool_kernel(att_ref, feat_ref, o_ref):
    a = att_ref[0]                                    # (1, P) f32
    a = a - jnp.max(a, axis=-1, keepdims=True)
    e = jnp.exp(a)
    w = e / jnp.sum(e, axis=-1, keepdims=True)        # softmax over patches
    o_ref[0] = jnp.dot(w, feat_ref[0], preferred_element_type=jnp.float32)


def mil_pool(att3, feat3):
    b, p, f = feat3.shape
    out = pl.pallas_call(
        _mil_pool_kernel,
        out_shape=jax.ShapeDtypeStruct((b, 1, f), jnp.float32),
        grid=(b,),
        in_specs=[pl.BlockSpec((1, 1, p), lambda i: (i, 0, 0)),
                  pl.BlockSpec((1, p, f), lambda i: (i, 0, 0))],
        out_specs=pl.BlockSpec((1, 1, f), lambda i: (i, 0, 0)),
        compiler_params=pltpu.CompilerParams(
            dimension_semantics=("parallel",)),
    )(att3, feat3)
    return out.reshape(b, f)   # squeeze(1)


# ---------------------------------------------------------------------------
# Deterministic parameter construction (shapes from ResNet18 + MILAttention).
# Conv weights are stored once as bf16 (K, O) GEMM matrices.
# ---------------------------------------------------------------------------
def _he_conv(key, o, c, kh, kw):
    return jax.random.normal(key, (o, c, kh, kw), jnp.float32) * math.sqrt(
        2.0 / (c * kh * kw))


def _bn_fold(key, c, eps=1e-5):
    k1, k2 = jax.random.split(key)
    gamma = 1.0 + 0.02 * jax.random.normal(k1, (c,), jnp.float32)
    beta = 0.02 * jax.random.normal(k2, (c,), jnp.float32)
    mean = jnp.zeros((c,), jnp.float32)
    var = jnp.ones((c,), jnp.float32)
    scale = gamma / jnp.sqrt(var + eps)
    shift = beta - mean * scale
    return scale, shift


def _conv_params(key, cin, cout, kh, kw, stride, pad):
    kw_key, bn_key = jax.random.split(key)
    w = _he_conv(kw_key, cout, cin, kh, kw)        # PyTorch layout (O, C, kh, kw)
    scale, shift = _bn_fold(bn_key, cout)
    k = cin * kh * kw
    wmat = w.reshape(cout, k).T                    # (K, O), (c, kh, kw)-major
    kpad = k if k % 8 == 0 else ((k + 127) // 128) * 128
    if kpad != k:
        wmat = jnp.pad(wmat, ((0, kpad - k), (0, 0)))
    return {'wmat': wmat.astype(jnp.bfloat16), 'scale': scale, 'shift': shift,
            'kh': kh, 'kw': kw, 'stride': stride, 'pad': pad}


def _make_block(keys, cin, cout, stride):
    blk = {
        'conv1': _conv_params(next(keys), cin, cout, 3, 3, stride, 1),
        'conv2': _conv_params(next(keys), cout, cout, 3, 3, 1, 1),
        'down': None,
    }
    if stride != 1 or cin != cout:
        blk['down'] = _conv_params(next(keys), cin, cout, 1, 1, stride, 0)
    return blk


def build_params(key, feature_len=512, linear_len=256):
    keys = iter(jax.random.split(key, 64))
    params = {}
    params['stem'] = _conv_params(next(keys), 3, 64, 7, 7, 2, 3)
    blocks = []
    for cin, cout, stride in [(64, 64, 1), (64, 128, 2),
                              (128, 256, 2), (256, 512, 2)]:
        blocks.append(_make_block(keys, cin, cout, stride))
        blocks.append(_make_block(keys, cout, cout, 1))
    params['blocks'] = blocks

    def lin(k, fan_in, shape):
        return jax.random.normal(k, shape, jnp.float32) * math.sqrt(1.0 / fan_in)

    # head: Linear(512, featureLength, bias=False) stored as (512, F) etc.
    params['wfc'] = lin(next(keys), 512, (512, feature_len)).astype(jnp.bfloat16)
    params['wv'] = lin(next(keys), feature_len,
                       (feature_len, linear_len)).astype(jnp.bfloat16)
    params['bv'] = 0.01 * jax.random.normal(next(keys), (1, linear_len), jnp.float32)
    params['wu'] = lin(next(keys), feature_len,
                       (feature_len, linear_len)).astype(jnp.bfloat16)
    params['bu'] = 0.01 * jax.random.normal(next(keys), (1, linear_len), jnp.float32)
    params['ww'] = lin(next(keys), linear_len, (linear_len, 1)).astype(jnp.bfloat16)
    params['bw'] = 0.01 * jax.random.normal(next(keys), (1, 1), jnp.float32)
    return params


# ---------------------------------------------------------------------------
# MILNet forward.
# ---------------------------------------------------------------------------
def milnet_forward(x, params):
    b, p, c, h, w = x.shape
    y = x.reshape(b * p, c, h, w)
    y = jnp.transpose(y, (0, 2, 3, 1)).astype(jnp.bfloat16)       # NHWC bf16
    # stem: conv7x7/s2 + BN + ReLU, then maxpool3x3/s2/p1
    y = conv_bn(y, params['stem'], relu=True)
    y = lax.reduce_window(y, jnp.array(-jnp.inf, y.dtype), lax.max,
                          (1, 3, 3, 1), (1, 2, 2, 1),
                          [(0, 0), (1, 1), (1, 1), (0, 0)])
    # layer1..layer4 (2 basic blocks each), residual+relu fused in-kernel
    for blk in params['blocks']:
        y = basic_block(y, blk)
    # adaptive avgpool (1,1) + flatten
    y = jnp.mean(y.astype(jnp.float32), axis=(1, 2))              # (B*P, 512)
    # MIL head: flattened fc/V/U/att GEMMs, then per-batch softmax + bmm.
    feat, att = mil_feat(y.astype(jnp.bfloat16), params)          # (B*P,F),(B*P,1)
    f = feat.shape[-1]
    return mil_pool(att.reshape(b, 1, p), feat.reshape(b, p, f))  # (B, F)


if __name__ == "__main__":
    root = jax.random.PRNGKey(0)
    kx, kp = jax.random.split(root)
    B, P, C, H, W = 2, 3, 3, 32, 32
    x = jax.random.normal(kx, (B, P, C, H, W), jnp.float32)
    params = build_params(kp)

    out = milnet_forward(x, params)
    out = jax.block_until_ready(out)

    assert out.shape == (B, 512), out.shape
    assert bool(jnp.all(jnp.isfinite(out)))
    print("KERNEL_OK")
</pallas_src>

<mosaic_0001>
module attributes {stable_mosaic.version = 11 : i64} {
  func.func @_conv_gemm_kernel(%arg0: i32, %arg1: memref<512x256xbf16, #tpu.memory_space<vmem>>, %arg2: memref<256x64xbf16, #tpu.memory_space<vmem>>, %arg3: memref<1x64xf32, #tpu.memory_space<vmem>>, %arg4: memref<1x64xf32, #tpu.memory_space<vmem>>, %arg5: memref<512x64xbf16, #tpu.memory_space<vmem>>) attributes {dimension_semantics = [#tpu.dimension_semantics<parallel>], iteration_bounds = array<i64: 3>, scalar_prefetch = 0 : i64, scratch_operands = 0 : i64, tpu.core_type = #tpu.core_type<tc>, window_params = [{transform_indices = @transform_0, window_bounds = array<i64: 512, 256>}, {pipeline_mode = #tpu.pipeline_mode<synchronous>, transform_indices = @transform_1, window_bounds = array<i64: 256, 64>}, {pipeline_mode = #tpu.pipeline_mode<synchronous>, transform_indices = @transform_2, window_bounds = array<i64: 1, 64>}, {pipeline_mode = #tpu.pipeline_mode<synchronous>, transform_indices = @transform_3, window_bounds = array<i64: 1, 64>}, {transform_indices = @transform_4, window_bounds = array<i64: 512, 64>}]} {
    %c0 = arith.constant 0 : index
    %c0_0 = arith.constant 0 : index
    %0 = vector.load %arg1[%c0, %c0_0] : memref<512x256xbf16, #tpu.memory_space<vmem>>, vector<512x256xbf16>
    %c0_1 = arith.constant 0 : index
    %c0_2 = arith.constant 0 : index
    %1 = vector.load %arg2[%c0_1, %c0_2] : memref<256x64xbf16, #tpu.memory_space<vmem>>, vector<256x64xbf16>
    %cst = arith.constant dense<0.000000e+00> : vector<512x64xf32>
    %2 = tpu.matmul %0, %1, %cst {dimension_numbers = #tpu.dot_dimension_numbers<[1], [0], [0], [1], [0, 0, 1, 1], [], []>} : vector<512x256xbf16>, vector<256x64xbf16>, vector<512x64xf32> -> vector<512x64xf32>
    %c0_3 = arith.constant 0 : index
    %c0_4 = arith.constant 0 : index
    %3 = vector.load %arg3[%c0_3, %c0_4] : memref<1x64xf32, #tpu.memory_space<vmem>>, vector<1x64xf32>
    %4 = vector.broadcast %3 : vector<1x64xf32> to vector<512x64xf32>
    %5 = arith.mulf %2, %4 : vector<512x64xf32>
    %c0_5 = arith.constant 0 : index
    %c0_6 = arith.constant 0 : index
    %6 = vector.load %arg4[%c0_5, %c0_6] : memref<1x64xf32, #tpu.memory_space<vmem>>, vector<1x64xf32>
    %7 = vector.broadcast %6 : vector<1x64xf32> to vector<512x64xf32>
    %8 = arith.addf %5, %7 : vector<512x64xf32>
    %cst_7 = arith.constant 0.000000e+00 : f32
    %9 = vector.broadcast %cst_7 : f32 to vector<512x64xf32>
    %10 = arith.maximumf %8, %9 : vector<512x64xf32>
    %11 = arith.truncf %10 : vector<512x64xf32> to vector<512x64xbf16>
    %c0_8 = arith.constant 0 : index
    %c0_9 = arith.constant 0 : index
    %12 = vector.load %arg5[%c0_8, %c0_9] : memref<512x64xbf16, #tpu.memory_space<vmem>>, vector<512x64xbf16>
    tpu.vector_store %arg5[%c0_8, %c0_9], %11 {strides = array<i32>} : memref<512x64xbf16, #tpu.memory_space<vmem>>, vector<512x64xbf16>,
    return
  }
  func.func @transform_0(%arg0: i32) -> (i32, i32) {
    %c0_i32 = arith.constant 0 : i32
    %c0_i32_0 = arith.constant 0 : i32
    return %arg0, %c0_i32 : i32, i32
  }
  func.func @transform_1(%arg0: i32) -> (i32, i32) {
    %c0_i32 = arith.constant 0 : i32
    %c0_i32_0 = arith.constant 0 : i32
    %c0_i32_1 = arith.constant 0 : i32
    return %c0_i32, %c0_i32_0 : i32, i32
  }
  func.func @transform_2(%arg0: i32) -> (i32, i32) {
    %c0_i32 = arith.constant 0 : i32
    %c0_i32_0 = arith.constant 0 : i32
    %c0_i32_1 = arith.constant 0 : i32
    return %c0_i32, %c0_i32_0 : i32, i32
  }
  func.func @transform_3(%arg0: i32) -> (i32, i32) {
    %c0_i32 = arith.constant 0 : i32
    %c0_i32_0 = arith.constant 0 : i32
    %c0_i32_1 = arith.constant 0 : i32
    return %c0_i32, %c0_i32_0 : i32, i32
  }
  func.func @transform_4(%arg0: i32) -> (i32, i32) {
    %c0_i32 = arith.constant 0 : i32
    %c0_i32_0 = arith.constant 0 : i32
    return %arg0, %c0_i32 : i32, i32
  }
}

</mosaic_0001>

<llo_original>
// kernel: tpu_custom_call.1
$region0: #{tpu_custom_call.1}
  #allocation0 [shape = 'u32[]', space=smem, size = 0x4, offset = 0x4, fixed_abs, tag = 'smem constant byte address 0x4 - core index']
  #allocation1 [shape = 'u32[72,128]{1,0:T(1,128)}', space=vmem, size = 0x9000, scoped, tag = 'internal scratch']
  %s0 = inlined_call_operand.hbm [shape: bf16[1536,256], index: 0, kind: input, shape index: {}]
  %s1 = inlined_call_operand.vmem [shape: bf16[256,64], index: 1, kind: input, shape index: {}]
  %s2 = inlined_call_operand.vmem [shape: f32[1,64], index: 2, kind: input, shape index: {}]
  %s3 = inlined_call_operand.vmem [shape: f32[1,64], index: 3, kind: input, shape index: {}]
  %s4 = inlined_call_operand.vmem [shape: bf16[1536,64], index: 4, kind: output, shape index: {}]
  %s5 = sld [smem:[#allocation0]]
  $region53: #{tpu_custom_call.1} parent=0
    _
  %s7 = ssub.s32 1, %s5
  %s8 = scalar_select 0, %s7, %s5
  $region1: #{tpu_custom_call.1} parent=0
    #allocation2 [shape = 'u8[524288]{0}', space=vmem, size = 0x80000, scoped, tag = 'input window, operand 0']
    #allocation3 [shape = 's32[2]{0}', space=sflag, size = 0x8, scoped, tag = 'scoped memory for tpu_custom_call.1']
    %9 = vsyncpa [#allocation3], 0
    %s10 = scalar_lea.sflag [#allocation3], 1
    %11 = vsyncpa %s10, 0
    loop: start=0, step=1, limit=5
    $region2: #{tpu_custom_call.1} parent=1 // loop_pre_header
      _
    $region3: #{tpu_custom_call.1} parent=1 // loop_header
      %s13 = sphi 0, %s17
      %p14 = scmp.ge.s32.totalorder %s13, 5
      %s23 = sphi 0, %s25
      %s26 = sphi 0, %s23
      %s27 = sphi 0, %s26
      %s43 = sphi 0, %s27
      %s47 = sphi 0, %s47
      %s49 = sphi 0, %s47
      %s50 = sphi 0, %s49
      %s64 = sphi 0, %s50
      %s68 = sphi 0, %s68
      %s70 = sphi 0, %s68
      %s71 = sphi 0, %s70
      %s85 = sphi 0, %s71
      %s89 = sphi 0, %s89
      %s91 = sphi 0, %s89
      %s92 = sphi 0, %s91
      %s106 = sphi 0, %s92
      %s112 = sphi 0, %s114
      %s115 = sphi 0, %s112
      %s116 = sphi 0, %s115
      %s132 = sphi 0, %s116
    $region4: #{tpu_custom_call.1} parent=1 // loop_header_branch
      %16 = sbr.rel (%p14) target = $region8
    $region5: #{tpu_custom_call.1} parent=1 // loop_body
      %s18 = ssub.s32 %s13, 1
      %s19 = ssub.s32 %s13, 2
      %s20 = sadd.s32 %s13, 1
      %s21 = ssub.s32 %s13, %s20
      %p22 = scmp.eq.s32.totalorder %s21, 0
      %s24 = sadd.s32 %s23, 1
      %s25 = scalar_select %p22, %s23, %s24
      %p28 = pneg %p22
      %p29 = scmp.eq.s32.totalorder %s13, 2
      %p30 = por %p28, %p29
      %p31 = scmp.ne.s32.totalorder %s23, %s26
      %p32 = scmp.eq.s32.totalorder %s13, 0
      %p33 = por %p31, %p32
      %p34 = scmp.ne.s32.totalorder %s23, %s26
      %p35 = scmp.eq.s32.totalorder %s18, 2
      %p36 = por %p34, %p35
      %p37 = scmp.ne.s32.totalorder %s26, %s27
      %p38 = scmp.eq.s32.totalorder %s18, 0
      %p39 = por %p37, %p38
      %p40 = scmp.ne.s32.totalorder %s26, %s27
      %p41 = scmp.eq.s32.totalorder %s19, 2
      %p42 = por %p40, %p41
      %p44 = scmp.ne.s32.totalorder %s27, %s43
      %p45 = scmp.eq.s32.totalorder %s19, 0
      %p46 = por %p44, %p45
      %s48 = sadd.s32 %s47, 1
      %p51 = scmp.eq.s32.totalorder %s13, 2
      %p52 = scmp.ne.s32.totalorder %s47, %s49
      %p53 = scmp.eq.s32.totalorder %s13, 0
      %p54 = por %p52, %p53
      %p55 = scmp.ne.s32.totalorder %s47, %s49
      %p56 = scmp.eq.s32.totalorder %s18, 2
      %p57 = por %p55, %p56
      %p58 = scmp.ne.s32.totalorder %s49, %s50
      %p59 = scmp.eq.s32.totalorder %s18, 0
      %p60 = por %p58, %p59
      %p61 = scmp.ne.s32.totalorder %s49, %s50
      %p62 = scmp.eq.s32.totalorder %s19, 2
      %p63 = por %p61, %p62
      %p65 = scmp.ne.s32.totalorder %s50, %s64
      %p66 = scmp.eq.s32.totalorder %s19, 0
      %p67 = por %p65, %p66
      %s69 = sadd.s32 %s68, 1
      %p72 = scmp.eq.s32.totalorder %s13, 2
      %p73 = scmp.ne.s32.totalorder %s68, %s70
      %p74 = scmp.eq.s32.totalorder %s13, 0
      %p75 = por %p73, %p74
      %p76 = scmp.ne.s32.totalorder %s68, %s70
      %p77 = scmp.eq.s32.totalorder %s18, 2
      %p78 = por %p76, %p77
      %p79 = scmp.ne.s32.totalorder %s70, %s71
      %p80 = scmp.eq.s32.totalorder %s18, 0
      %p81 = por %p79, %p80
      %p82 = scmp.ne.s32.totalorder %s70, %s71
      %p83 = scmp.eq.s32.totalorder %s19, 2
      %p84 = por %p82, %p83
      %p86 = scmp.ne.s32.totalorder %s71, %s85
      %p87 = scmp.eq.s32.totalorder %s19, 0
      %p88 = por %p86, %p87
      %s90 = sadd.s32 %s89, 1
      %p93 = scmp.eq.s32.totalorder %s13, 2
      %p94 = scmp.ne.s32.totalorder %s89, %s91
      %p95 = scmp.eq.s32.totalorder %s13, 0
      %p96 = por %p94, %p95
      %p97 = scmp.ne.s32.totalorder %s89, %s91
      %p98 = scmp.eq.s32.totalorder %s18, 2
      %p99 = por %p97, %p98
      %p100 = scmp.ne.s32.totalorder %s91, %s92
      %p101 = scmp.eq.s32.totalorder %s18, 0
      %p102 = por %p100, %p101
      %p103 = scmp.ne.s32.totalorder %s91, %s92
      %p104 = scmp.eq.s32.totalorder %s19, 2
      %p105 = por %p103, %p104
      %p107 = scmp.ne.s32.totalorder %s92, %s106
      %p108 = scmp.eq.s32.totalorder %s19, 0
      %p109 = por %p107, %p108
      %s110 = ssub.s32 %s13, %s20
      %p111 = scmp.eq.s32.totalorder %s110, 0
      %s113 = sadd.s32 %s112, 1
      %s114 = scalar_select %p111, %s112, %s113
      %p117 = pneg %p111
      %p118 = scmp.eq.s32.totalorder %s13, 2
      %p119 = por %p117, %p118
      %p120 = scmp.ne.s32.totalorder %s112, %s115
      %p121 = scmp.eq.s32.totalorder %s13, 0
      %p122 = por %p120, %p121
      %p123 = scmp.ne.s32.totalorder %s112, %s115
      %p124 = scmp.eq.s32.totalorder %s18, 2
      %p125 = por %p123, %p124
      %p126 = scmp.ne.s32.totalorder %s115, %s116
      %p127 = scmp.eq.s32.totalorder %s18, 0
      %p128 = por %p126, %p127
      %p129 = scmp.ne.s32.totalorder %s115, %s116
      %p130 = scmp.eq.s32.totalorder %s19, 2
      %p131 = por %p129, %p130
      %p133 = scmp.ne.s32.totalorder %s116, %s132
      %p134 = scmp.eq.s32.totalorder %s19, 0
      %p135 = por %p133, %p134
      %p136 = scmp.le.s32.totalorder 1, %s13
      %p137 = scmp.lt.s32.totalorder %s13, 4
      %p138 = pnand %p136, %p137
      %p139 = pneg %p138
      // Predicated region
      $region9: #{tpu_custom_call.1} parent=5 // pred_check
        _
      $region10: #{tpu_custom_call.1} parent=5 // pred_check_branch
        %141 = sbr.rel (%p138) target = $region12
      $region11: #{tpu_custom_call.1} parent=5 // pred_region
        %s142 = ssub.s32 %s13, 1
        // Predicated region
        $region13: #{tpu_custom_call.1} parent=11 // pred_check
          %p143 = pneg %p60
        $region14: #{tpu_custom_call.1} parent=11 // pred_check_branch
          %145 = sbr.rel (%p143) target = $region16
        $region15: #{tpu_custom_call.1} parent=11 // pred_region
          _
        $region16: #{tpu_custom_call.1} parent=11 // pred_fallthru
          _
        // Predicated region
        $region17: #{tpu_custom_call.1} parent=11 // pred_check
          %p146 = pneg %p81
        $region18: #{tpu_custom_call.1} parent=11 // pred_check_branch
          %148 = sbr.rel (%p146) target = $region20
        $region19: #{tpu_custom_call.1} parent=11 // pred_region
          _
        $region20: #{tpu_custom_call.1} parent=11 // pred_fallthru
          _
        // Predicated region
        $region21: #{tpu_custom_call.1} parent=11 // pred_check
          %p149 = pneg %p102
        $region22: #{tpu_custom_call.1} parent=11 // pred_check_branch
          %151 = sbr.rel (%p149) target = $region24
        $region23: #{tpu_custom_call.1} parent=11 // pred_region
          _
        $region24: #{tpu_custom_call.1} parent=11 // pred_fallthru
          _
      $region12: #{tpu_custom_call.1} parent=5 // pred_fallthru
        _
      %p152 = scmp.lt.s32.totalorder %s13, 3
      // Predicated region
      $region25: #{tpu_custom_call.1} parent=5 // pred_check
        %p153 = pneg %p152
      $region26: #{tpu_custom_call.1} parent=5 // pred_check_branch
        %155 = sbr.rel (%p153) target = $region28
      $region27: #{tpu_custom_call.1} parent=5 // pred_region
        // Predicated region
        $region29: #{tpu_custom_call.1} parent=27 // pred_check
          %p156 = pneg %p33
        $region30: #{tpu_custom_call.1} parent=27 // pred_check_branch
          %158 = sbr.rel (%p156) target = $region32
        $region31: #{tpu_custom_call.1} parent=27 // pred_region
          %s159 = sand.u32 %s23, 1
          %s160 = scalar_lea.sflag [#allocation3], %s159
          %s161 = sand.u32 %s23, 1
          %s162 = smul.addr %s161, 512
          %s163 = scalar_lea.vmem [#allocation2], %s162
          %s164 = smul.u32 64, %s13
          %166 = vsyncadd %s160, 0
          %s167 = smul.addr %s164, 2
          %s168 = smul.addr %s167, 4
          %s169 = scalar_lea.hbm %s0, %s168
          %s170 = sshll.u32 %s169, 4
          %s171 = int_to_ptr.hbm [resolvable:$true] %s170
          %s172 = sshll.u32 %s163, 4
          %s173 = int_to_ptr.vmem [resolvable:$true] %s172
          %178 = dma.hbm_to_vmem [thread:$0]  %s171, 8192, %s173, %s160, 128, 128, 8
        $region32: #{tpu_custom_call.1} parent=27 // pred_fallthru
          _
      $region28: #{tpu_custom_call.1} parent=5 // pred_fallthru
        _
      %p179 = scmp.le.s32.totalorder 1, %s13
      %p180 = scmp.lt.s32.totalorder %s13, 4
      %p181 = pnand %p179, %p180
      %p182 = pneg %p181
      // Predicated region
      $region33: #{tpu_custom_call.1} parent=5 // pred_check
        _
      $region34: #{tpu_custom_call.1} parent=5 // pred_check_branch
        %184 = sbr.rel (%p181) target = $region36
      $region35: #{tpu_custom_call.1} parent=5 // pred_region
        %s185 = ssub.s32 %s13, 1
        %s186 = sand.u32 %s26, 1
        %s187 = scalar_lea.sflag [#allocation3], %s186
        %s188 = sand.u32 %s26, 1
        %s189 = smul.addr %s188, 512
        %s190 = scalar_lea.vmem [#allocation2], %s189
        // Predicated region
        $region37: #{tpu_custom_call.1} parent=35 // pred_check
          %p191 = pneg %p39
        $region38: #{tpu_custom_call.1} parent=35 // pred_check_branch
          %193 = sbr.rel (%p191) target = $region40
        $region39: #{tpu_custom_call.1} parent=35 // pred_region
          %195 = dma.done %s187, 8192
        $region40: #{tpu_custom_call.1} parent=35 // pred_fallthru
          _
        %s196 = sand.u32 %s26, 1
        %s197 = scalar_lea.sflag [#allocation3], %s196
        %s198 = sand.u32 %s26, 1
        %s199 = smul.addr %s198, 512
        %s200 = scalar_lea.vmem [#allocation2], %s199
        %p201 = pneg %p39
        %p202 = pneg %p36
        %p203 = pneg %p60
        %p204 = pneg %p57
        %p205 = pneg %p81
        %p206 = pneg %p78
        %p207 = pneg %p102
        %p208 = pneg %p99
        %p209 = pneg %p128
        %p210 = pneg %p125
        %s211 = smul.u32 64, %s18
        %p212 = scmp.lt.s32.totalorder %s211, 191
        %s213 = scalar_select %p212, %s211, 191
        %s214 = smul.addr %s213, 4
        %s215 = scalar_lea.vmem %s4, %s214
        %s216 = smul.u32 64, %s18
        %s217 = smul.u32 64, %s18
        %p218 = scmp.lt.s32.totalorder %s217, 191
        %s219 = scalar_select %p218, %s217, 191
        %s220 = smul.addr %s219, 4
        %s221 = scalar_lea.vmem %s4, %s220
        %s222 = smul.u32 64, %s18
        %v223 = vld [vmem:[%s190] sm:$0xff]
        %v224 = vld [vmem:[%s190 + $0x8] sm:$0xff]
        %v225 = vld [vmem:[%s190 + $0x10] sm:$0xff]
        %v226 = vld [vmem:[%s190 + $0x18] sm:$0xff]
        %v227 = vld [vmem:[%s190 + $0x20] sm:$0xff]
        %v228 = vld [vmem:[%s190 + $0x28] sm:$0xff]
        %v229 = vld [vmem:[%s190 + $0x30] sm:$0xff]
        %v230 = vld [vmem:[%s190 + $0x38] sm:$0xff]
        %v231 = vld [vmem:[%s190 + $0x40] sm:$0xff]
        %v232 = vld [vmem:[%s190 + $0x48] sm:$0xff]
        %v233 = vld [vmem:[%s190 + $0x50] sm:$0xff]
        %v234 = vld [vmem:[%s190 + $0x58] sm:$0xff]
        %v235 = vld [vmem:[%s190 + $0x60] sm:$0xff]
        %v236 = vld [vmem:[%s190 + $0x68] sm:$0xff]
        %v237 = vld [vmem:[%s190 + $0x70] sm:$0xff]
        %v238 = vld [vmem:[%s190 + $0x78] sm:$0xff]
        %v239 = vld [vmem:[%s190 + $0x80] sm:$0xff]
        %v240 = vld [vmem:[%s190 + $0x88] sm:$0xff]
        %v241 = vld [vmem:[%s190 + $0x90] sm:$0xff]
        %v242 = vld [vmem:[%s190 + $0x98] sm:$0xff]
        %v243 = vld [vmem:[%s190 + $0xa0] sm:$0xff]
        %v244 = vld [vmem:[%s190 + $0xa8] sm:$0xff]
        %v245 = vld [vmem:[%s190 + $0xb0] sm:$0xff]
        %v246 = vld [vmem:[%s190 + $0xb8] sm:$0xff]
        %v247 = vld [vmem:[%s190 + $0xc0] sm:$0xff]
        %v248 = vld [vmem:[%s190 + $0xc8] sm:$0xff]
        %v249 = vld [vmem:[%s190 + $0xd0] sm:$0xff]
        %v250 = vld [vmem:[%s190 + $0xd8] sm:$0xff]
        %v251 = vld [vmem:[%s190 + $0xe0] sm:$0xff]
        %v252 = vld [vmem:[%s190 + $0xe8] sm:$0xff]
        %v253 = vld [vmem:[%s190 + $0xf0] sm:$0xff]
        %v254 = vld [vmem:[%s190 + $0xf8] sm:$0xff]
        %v255 = vld [vmem:[%s190 + $0x100] sm:$0xff]
        %v256 = vld [vmem:[%s190 + $0x108] sm:$0xff]
        %v257 = vld [vmem:[%s190 + $0x110] sm:$0xff]
        %v258 = vld [vmem:[%s190 + $0x118] sm:$0xff]
        %v259 = vld [vmem:[%s190 + $0x120] sm:$0xff]
        %v260 = vld [vmem:[%s190 + $0x128] sm:$0xff]
        %v261 = vld [vmem:[%s190 + $0x130] sm:$0xff]
        %v262 = vld [vmem:[%s190 + $0x138] sm:$0xff]
        %v263 = vld [vmem:[%s190 + $0x140] sm:$0xff]
        %v264 = vld [vmem:[%s190 + $0x148] sm:$0xff]
        %v265 = vld [vmem:[%s190 + $0x150] sm:$0xff]
        %v266 = vld [vmem:[%s190 + $0x158] sm:$0xff]
        %v267 = vld [vmem:[%s190 + $0x160] sm:$0xff]
        %v268 = vld [vmem:[%s190 + $0x168] sm:$0xff]
        %v269 = vld [vmem:[%s190 + $0x170] sm:$0xff]
        %v270 = vld [vmem:[%s190 + $0x178] sm:$0xff]
        %v271 = vld [vmem:[%s190 + $0x180] sm:$0xff]
        %v272 = vld [vmem:[%s190 + $0x188] sm:$0xff]
        %v273 = vld [vmem:[%s190 + $0x190] sm:$0xff]
        %v274 = vld [vmem:[%s190 + $0x198] sm:$0xff]
        %v275 = vld [vmem:[%s190 + $0x1a0] sm:$0xff]
        %v276 = vld [vmem:[%s190 + $0x1a8] sm:$0xff]
        %v277 = vld [vmem:[%s190 + $0x1b0] sm:$0xff]
        %v278 = vld [vmem:[%s190 + $0x1b8] sm:$0xff]
        %v279 = vld [vmem:[%s190 + $0x1c0] sm:$0xff]
        %v280 = vld [vmem:[%s190 + $0x1c8] sm:$0xff]
        %v281 = vld [vmem:[%s190 + $0x1d0] sm:$0xff]
        %v282 = vld [vmem:[%s190 + $0x1d8] sm:$0xff]
        %v283 = vld [vmem:[%s190 + $0x1e0] sm:$0xff]
        %v284 = vld [vmem:[%s190 + $0x1e8] sm:$0xff]
        %v285 = vld [vmem:[%s190 + $0x1f0] sm:$0xff]
        %v286 = vld [vmem:[%s190 + $0x1f8] sm:$0xff]
        %v287 = vld [vmem:[%s1] sm:$0xf]
        %v288 = vld [vmem:[%s1 + $0x4] sm:$0xf]
        %v289 = vld [vmem:[%s1 + $0x8] sm:$0xf]
        %v290 = vld [vmem:[%s1 + $0xc] sm:$0xf]
        %v291 = vld [vmem:[%s1 + $0x10] sm:$0xf]
        %v292 = vld [vmem:[%s1 + $0x14] sm:$0xf]
        %v293 = vld [vmem:[%s1 + $0x18] sm:$0xf]
        %v294 = vld [vmem:[%s1 + $0x1c] sm:$0xf]
        %v295 = vld [vmem:[%s1 + $0x20] sm:$0xf]
        %v296 = vld [vmem:[%s1 + $0x24] sm:$0xf]
        %v297 = vld [vmem:[%s1 + $0x28] sm:$0xf]
        %v298 = vld [vmem:[%s1 + $0x2c] sm:$0xf]
        %v299 = vld [vmem:[%s1 + $0x30] sm:$0xf]
        %v300 = vld [vmem:[%s1 + $0x34] sm:$0xf]
        %v301 = vld [vmem:[%s1 + $0x38] sm:$0xf]
        %v302 = vld [vmem:[%s1 + $0x3c] sm:$0xf]
        %v303 = vld [vmem:[%s1 + $0x40] sm:$0xf]
        %v304 = vld [vmem:[%s1 + $0x44] sm:$0xf]
        %v305 = vld [vmem:[%s1 + $0x48] sm:$0xf]
        %v306 = vld [vmem:[%s1 + $0x4c] sm:$0xf]
        %v307 = vld [vmem:[%s1 + $0x50] sm:$0xf]
        %v308 = vld [vmem:[%s1 + $0x54] sm:$0xf]
        %v309 = vld [vmem:[%s1 + $0x58] sm:$0xf]
        %v310 = vld [vmem:[%s1 + $0x5c] sm:$0xf]
        %v311 = vld [vmem:[%s1 + $0x60] sm:$0xf]
        %v312 = vld [vmem:[%s1 + $0x64] sm:$0xf]
        %v313 = vld [vmem:[%s1 + $0x68] sm:$0xf]
        %v314 = vld [vmem:[%s1 + $0x6c] sm:$0xf]
        %v315 = vld [vmem:[%s1 + $0x70] sm:$0xf]
        %v316 = vld [vmem:[%s1 + $0x74] sm:$0xf]
        %v317 = vld [vmem:[%s1 + $0x78] sm:$0xf]
        %v318 = vld [vmem:[%s1 + $0x7c] sm:$0xf]
        %v383 = vunpack.c.l.b16 %v223
        %v384 = vunpack.c.h.b16 %v223
        %v385 = vunpack.c.l.b16 %v224
        %v386 = vunpack.c.h.b16 %v224
        %v387 = vunpack.c.l.b16 %v225
        %v388 = vunpack.c.h.b16 %v225
        %v389 = vunpack.c.l.b16 %v226
        %v390 = vunpack.c.h.b16 %v226
        %v391 = vunpack.c.l.b16 %v227
        %v392 = vunpack.c.h.b16 %v227
        %v393 = vunpack.c.l.b16 %v228
        %v394 = vunpack.c.h.b16 %v228
        %v395 = vunpack.c.l.b16 %v229
        %v396 = vunpack.c.h.b16 %v229
        %v397 = vunpack.c.l.b16 %v230
        %v398 = vunpack.c.h.b16 %v230
        %v399 = vunpack.c.l.b16 %v231
        %v400 = vunpack.c.h.b16 %v231
        %v401 = vunpack.c.l.b16 %v232
        %v402 = vunpack.c.h.b16 %v232
        %v403 = vunpack.c.l.b16 %v233
        %v404 = vunpack.c.h.b16 %v233
        %v405 = vunpack.c.l.b16 %v234
        %v406 = vunpack.c.h.b16 %v234
        %v407 = vunpack.c.l.b16 %v235
        %v408 = vunpack.c.h.b16 %v235
        %v409 = vunpack.c.l.b16 %v236
        %v410 = vunpack.c.h.b16 %v236
        %v411 = vunpack.c.l.b16 %v237
        %v412 = vunpack.c.h.b16 %v237
        %v413 = vunpack.c.l.b16 %v238
        %v414 = vunpack.c.h.b16 %v238
        %v415 = vunpack.c.l.b16 %v239
        %v416 = vunpack.c.h.b16 %v239
        %v417 = vunpack.c.l.b16 %v240
        %v418 = vunpack.c.h.b16 %v240
        %v419 = vunpack.c.l.b16 %v241
        %v420 = vunpack.c.h.b16 %v241
        %v421 = vunpack.c.l.b16 %v242
        %v422 = vunpack.c.h.b16 %v242
        %v423 = vunpack.c.l.b16 %v243
        %v424 = vunpack.c.h.b16 %v243
        %v425 = vunpack.c.l.b16 %v244
        %v426 = vunpack.c.h.b16 %v244
        %v427 = vunpack.c.l.b16 %v245
        %v428 = vunpack.c.h.b16 %v245
        %v429 = vunpack.c.l.b16 %v246
        %v430 = vunpack.c.h.b16 %v246
        %v431 = vunpack.c.l.b16 %v247
        %v432 = vunpack.c.h.b16 %v247
        %v433 = vunpack.c.l.b16 %v248
        %v434 = vunpack.c.h.b16 %v248
        %v435 = vunpack.c.l.b16 %v249
        %v436 = vunpack.c.h.b16 %v249
        %v437 = vunpack.c.l.b16 %v250
        %v438 = vunpack.c.h.b16 %v250
        %v439 = vunpack.c.l.b16 %v251
        %v440 = vunpack.c.h.b16 %v251
        %v441 = vunpack.c.l.b16 %v252
        %v442 = vunpack.c.h.b16 %v252
        %v443 = vunpack.c.l.b16 %v253
        %v444 = vunpack.c.h.b16 %v253
        %v445 = vunpack.c.l.b16 %v254
        %v446 = vunpack.c.h.b16 %v254
        %v447 = vunpack.c.l.b16 %v255
        %v448 = vunpack.c.h.b16 %v255
        %v449 = vunpack.c.l.b16 %v256
        %v450 = vunpack.c.h.b16 %v256
        %v451 = vunpack.c.l.b16 %v257
        %v452 = vunpack.c.h.b16 %v257
        %v453 = vunpack.c.l.b16 %v258
        %v454 = vunpack.c.h.b16 %v258
        %v455 = vunpack.c.l.b16 %v259
        %v456 = vunpack.c.h.b16 %v259
        %v457 = vunpack.c.l.b16 %v260
        %v458 = vunpack.c.h.b16 %v260
        %v459 = vunpack.c.l.b16 %v261
        %v460 = vunpack.c.h.b16 %v261
        %v461 = vunpack.c.l.b16 %v262
        %v462 = vunpack.c.h.b16 %v262
        %v463 = vunpack.c.l.b16 %v263
        %v464 = vunpack.c.h.b16 %v263
        %v465 = vunpack.c.l.b16 %v264
        %v466 = vunpack.c.h.b16 %v264
        %v467 = vunpack.c.l.b16 %v265
        %v468 = vunpack.c.h.b16 %v265
        %v469 = vunpack.c.l.b16 %v266
        %v470 = vunpack.c.h.b16 %v266
        %v471 = vunpack.c.l.b16 %v267
        %v472 = vunpack.c.h.b16 %v267
        %v473 = vunpack.c.l.b16 %v268
        %v474 = vunpack.c.h.b16 %v268
        %v475 = vunpack.c.l.b16 %v269
        %v476 = vunpack.c.h.b16 %v269
        %v477 = vunpack.c.l.b16 %v270
        %v478 = vunpack.c.h.b16 %v270
        %v479 = vunpack.c.l.b16 %v271
        %v480 = vunpack.c.h.b16 %v271
        %v481 = vunpack.c.l.b16 %v272
        %v482 = vunpack.c.h.b16 %v272
        %v483 = vunpack.c.l.b16 %v273
        %v484 = vunpack.c.h.b16 %v273
        %v485 = vunpack.c.l.b16 %v274
        %v486 = vunpack.c.h.b16 %v274
        %v487 = vunpack.c.l.b16 %v275
        %v488 = vunpack.c.h.b16 %v275
        %v489 = vunpack.c.l.b16 %v276
        %v490 = vunpack.c.h.b16 %v276
        %v491 = vunpack.c.l.b16 %v277
        %v492 = vunpack.c.h.b16 %v277
        %v493 = vunpack.c.l.b16 %v278
        %v494 = vunpack.c.h.b16 %v278
        %v495 = vunpack.c.l.b16 %v279
        %v496 = vunpack.c.h.b16 %v279
        %v497 = vunpack.c.l.b16 %v280
        %v498 = vunpack.c.h.b16 %v280
        %v499 = vunpack.c.l.b16 %v281
        %v500 = vunpack.c.h.b16 %v281
        %v501 = vunpack.c.l.b16 %v282
        %v502 = vunpack.c.h.b16 %v282
        %v503 = vunpack.c.l.b16 %v283
        %v504 = vunpack.c.h.b16 %v283
        %v505 = vunpack.c.l.b16 %v284
        %v506 = vunpack.c.h.b16 %v284
        %v507 = vunpack.c.l.b16 %v285
        %v508 = vunpack.c.h.b16 %v285
        %v509 = vunpack.c.l.b16 %v286
        %v510 = vunpack.c.h.b16 %v286
        %v511 = vpack.c.b16 %v385, %v383
        %v512 = vpack.c.b16 %v386, %v384
        %v513 = vpack.c.b16 %v389, %v387
        %v514 = vpack.c.b16 %v390, %v388
        %v515 = vpack.c.b16 %v393, %v391
        %v516 = vpack.c.b16 %v394, %v392
        %v517 = vpack.c.b16 %v397, %v395
        %v518 = vpack.c.b16 %v398, %v396
        %v519 = vpack.c.b16 %v401, %v399
        %v520 = vpack.c.b16 %v402, %v400
        %v521 = vpack.c.b16 %v405, %v403
        %v522 = vpack.c.b16 %v406, %v404
        %v523 = vpack.c.b16 %v409, %v407
        %v524 = vpack.c.b16 %v410, %v408
        %v525 = vpack.c.b16 %v413, %v411
        %v526 = vpack.c.b16 %v414, %v412
        %v527 = vpack.c.b16 %v417, %v415
        %v528 = vpack.c.b16 %v418, %v416
        %v529 = vpack.c.b16 %v421, %v419
        %v530 = vpack.c.b16 %v422, %v420
        %v531 = vpack.c.b16 %v425, %v423
        %v532 = vpack.c.b16 %v426, %v424
        %v533 = vpack.c.b16 %v429, %v427
        %v534 = vpack.c.b16 %v430, %v428
        %v535 = vpack.c.b16 %v433, %v431
        %v536 = vpack.c.b16 %v434, %v432
        %v537 = vpack.c.b16 %v437, %v435
        %v538 = vpack.c.b16 %v438, %v436
        %v539 = vpack.c.b16 %v441, %v439
        %v540 = vpack.c.b16 %v442, %v440
        %v541 = vpack.c.b16 %v445, %v443
        %v542 = vpack.c.b16 %v446, %v444
        %v543 = vpack.c.b16 %v449, %v447
        %v544 = vpack.c.b16 %v450, %v448
        %v545 = vpack.c.b16 %v453, %v451
        %v546 = vpack.c.b16 %v454, %v452
        %v547 = vpack.c.b16 %v457, %v455
        %v548 = vpack.c.b16 %v458, %v456
        %v549 = vpack.c.b16 %v461, %v459
        %v550 = vpack.c.b16 %v462, %v460
        %v551 = vpack.c.b16 %v465, %v463
        %v552 = vpack.c.b16 %v466, %v464
        %v553 = vpack.c.b16 %v469, %v467
        %v554 = vpack.c.b16 %v470, %v468
        %v555 = vpack.c.b16 %v473, %v471
        %v556 = vpack.c.b16 %v474, %v472
        %v557 = vpack.c.b16 %v477, %v475
        %v558 = vpack.c.b16 %v478, %v476
        %v559 = vpack.c.b16 %v481, %v479
        %v560 = vpack.c.b16 %v482, %v480
        %v561 = vpack.c.b16 %v485, %v483
        %v562 = vpack.c.b16 %v486, %v484
        %v563 = vpack.c.b16 %v489, %v487
        %v564 = vpack.c.b16 %v490, %v488
        %v565 = vpack.c.b16 %v493, %v491
        %v566 = vpack.c.b16 %v494, %v492
        %v567 = vpack.c.b16 %v497, %v495
        %v568 = vpack.c.b16 %v498, %v496
        %v569 = vpack.c.b16 %v501, %v499
        %v570 = vpack.c.b16 %v502, %v500
        %v571 = vpack.c.b16 %v505, %v503
        %v572 = vpack.c.b16 %v506, %v504
        %v573 = vpack.c.b16 %v509, %v507
        %v574 = vpack.c.b16 %v510, %v508
        %v671 = vunpack.c.l.b16 %v287
        %v672 = vunpack.c.l.b16 %v288
        %v673 = vunpack.c.l.b16 %v289
        %v674 = vunpack.c.l.b16 %v290
        %v675 = vunpack.c.l.b16 %v291
        %v676 = vunpack.c.l.b16 %v292
        %v677 = vunpack.c.l.b16 %v293
        %v678 = vunpack.c.l.b16 %v294
        %v679 = vunpack.c.l.b16 %v295
        %v680 = vunpack.c.l.b16 %v296
        %v681 = vunpack.c.l.b16 %v297
        %v682 = vunpack.c.l.b16 %v298
        %v683 = vunpack.c.l.b16 %v299
        %v684 = vunpack.c.l.b16 %v300
        %v685 = vunpack.c.l.b16 %v301
        %v686 = vunpack.c.l.b16 %v302
        %v687 = vunpack.c.l.b16 %v303
        %v688 = vunpack.c.l.b16 %v304
        %v689 = vunpack.c.l.b16 %v305
        %v690 = vunpack.c.l.b16 %v306
        %v691 = vunpack.c.l.b16 %v307
        %v692 = vunpack.c.l.b16 %v308
        %v693 = vunpack.c.l.b16 %v309
        %v694 = vunpack.c.l.b16 %v310
        %v695 = vunpack.c.l.b16 %v311
        %v696 = vunpack.c.l.b16 %v312
        %v697 = vunpack.c.l.b16 %v313
        %v698 = vunpack.c.l.b16 %v314
        %v699 = vunpack.c.l.b16 %v315
        %v700 = vunpack.c.l.b16 %v316
        %v701 = vunpack.c.l.b16 %v317
        %v702 = vunpack.c.l.b16 %v318
        %v703 = vpack.c.b16 %v672, %v671
        %v704 = vpack.c.b16 %v674, %v673
        %v705 = vpack.c.b16 %v676, %v675
        %v706 = vpack.c.b16 %v678, %v677
        %v707 = vpack.c.b16 %v680, %v679
        %v708 = vpack.c.b16 %v682, %v681
        %v709 = vpack.c.b16 %v684, %v683
        %v710 = vpack.c.b16 %v686, %v685
        %v711 = vpack.c.b16 %v688, %v687
        %v712 = vpack.c.b16 %v690, %v689
        %v713 = vpack.c.b16 %v692, %v691
        %v714 = vpack.c.b16 %v694, %v693
        %v715 = vpack.c.b16 %v696, %v695
        %v716 = vpack.c.b16 %v698, %v697
        %v717 = vpack.c.b16 %v700, %v699
        %v718 = vpack.c.b16 %v702, %v701
        %735 = vmatpush.bf16.msra.mxu0 %v710
        %736 = vmatpush.bf16.msra.mxu0 %v709
        %737 = vmatpush.bf16.msra.mxu0 %v708
        %738 = vmatpush.bf16.msra.mxu0 %v707
        %739 = vmatpush.bf16.msra.mxu0 %v706
        %740 = vmatpush.bf16.msra.mxu0 %v705
        %741 = vmatpush.bf16.msra.mxu0 %v704
        %742 = vmatpush.bf16.msra.mxu0 %v703
        %743 = vmatmul.bf16.gmra.mxu0 %v511
        %v744 = vpop.f32.mrf.mxu0
        %v745 = vadd.f32 0.0, %v744
        %v746 = vpop.f32.mrf.mxu0
        %v747 = vadd.f32 0.0, %v746
        %748 = vmatmul.bf16.gmra.mxu0 %v513
        %v749 = vpop.f32.mrf.mxu0
        %v750 = vadd.f32 0.0, %v749
        %v751 = vpop.f32.mrf.mxu0
        %v752 = vadd.f32 0.0, %v751
        %753 = vmatmul.bf16.gmra.mxu0 %v515
        %v754 = vpop.f32.mrf.mxu0
        %v755 = vadd.f32 0.0, %v754
        %v756 = vpop.f32.mrf.mxu0
        %v757 = vadd.f32 0.0, %v756
        %758 = vmatmul.bf16.gmra.mxu0 %v517
        %v759 = vpop.f32.mrf.mxu0
        %v760 = vadd.f32 0.0, %v759
        %v761 = vpop.f32.mrf.mxu0
        %v762 = vadd.f32 0.0, %v761
        %763 = vmatmul.bf16.gmra.mxu0 %v519
        %v764 = vpop.f32.mrf.mxu0
        %v765 = vadd.f32 0.0, %v764
        %v766 = vpop.f32.mrf.mxu0
        %v767 = vadd.f32 0.0, %v766
        %768 = vmatmul.bf16.gmra.mxu0 %v521
        %v769 = vpop.f32.mrf.mxu0
        %v770 = vadd.f32 0.0, %v769
        %v771 = vpop.f32.mrf.mxu0
        %v772 = vadd.f32 0.0, %v771
        %773 = vmatmul.bf16.gmra.mxu0 %v523
        %v774 = vpop.f32.mrf.mxu0
        %v775 = vadd.f32 0.0, %v774
        %v776 = vpop.f32.mrf.mxu0
        %v777 = vadd.f32 0.0, %v776
        %778 = vmatmul.bf16.gmra.mxu0 %v525
        %v779 = vpop.f32.mrf.mxu0
        %v780 = vadd.f32 0.0, %v779
        %v781 = vpop.f32.mrf.mxu0
        %v782 = vadd.f32 0.0, %v781
        %783 = vmatmul.bf16.gmra.mxu0 %v527
        %v784 = vpop.f32.mrf.mxu0
        %v785 = vadd.f32 0.0, %v784
        %v786 = vpop.f32.mrf.mxu0
        %v787 = vadd.f32 0.0, %v786
        %788 = vmatmul.bf16.gmra.mxu0 %v529
        %v789 = vpop.f32.mrf.mxu0
        %v790 = vadd.f32 0.0, %v789
        %v791 = vpop.f32.mrf.mxu0
        %v792 = vadd.f32 0.0, %v791
        %793 = vmatmul.bf16.gmra.mxu0 %v531
        %v794 = vpop.f32.mrf.mxu0
        %v795 = vadd.f32 0.0, %v794
        %v796 = vpop.f32.mrf.mxu0
        %v797 = vadd.f32 0.0, %v796
        %798 = vmatmul.bf16.gmra.mxu0 %v533
        %v799 = vpop.f32.mrf.mxu0
        %v800 = vadd.f32 0.0, %v799
        %v801 = vpop.f32.mrf.mxu0
        %v802 = vadd.f32 0.0, %v801
        %803 = vmatmul.bf16.gmra.mxu0 %v535
        %v804 = vpop.f32.mrf.mxu0
        %v805 = vadd.f32 0.0, %v804
        %v806 = vpop.f32.mrf.mxu0
        %v807 = vadd.f32 0.0, %v806
        %808 = vmatmul.bf16.gmra.mxu0 %v537
        %v809 = vpop.f32.mrf.mxu0
        %v810 = vadd.f32 0.0, %v809
        %v811 = vpop.f32.mrf.mxu0
        %v812 = vadd.f32 0.0, %v811
        %813 = vmatmul.bf16.gmra.mxu0 %v539
        %v814 = vpop.f32.mrf.mxu0
        %v815 = vadd.f32 0.0, %v814
        %v816 = vpop.f32.mrf.mxu0
        %v817 = vadd.f32 0.0, %v816
        %818 = vmatmul.bf16.gmra.mxu0 %v541
        %v819 = vpop.f32.mrf.mxu0
        %v820 = vadd.f32 0.0, %v819
        %v821 = vpop.f32.mrf.mxu0
        %v822 = vadd.f32 0.0, %v821
        %823 = vmatmul.bf16.gmra.mxu0 %v543
        %v824 = vpop.f32.mrf.mxu0
        %v825 = vadd.f32 0.0, %v824
        %v826 = vpop.f32.mrf.mxu0
        %v827 = vadd.f32 0.0, %v826
        %828 = vmatmul.bf16.gmra.mxu0 %v545
        %v829 = vpop.f32.mrf.mxu0
        %v830 = vadd.f32 0.0, %v829
        %v831 = vpop.f32.mrf.mxu0
        %v832 = vadd.f32 0.0, %v831
        %833 = vmatmul.bf16.gmra.mxu0 %v547
        %v834 = vpop.f32.mrf.mxu0
        %v835 = vadd.f32 0.0, %v834
        %v836 = vpop.f32.mrf.mxu0
        %v837 = vadd.f32 0.0, %v836
        %838 = vmatmul.bf16.gmra.mxu0 %v549
        %v839 = vpop.f32.mrf.mxu0
        %v840 = vadd.f32 0.0, %v839
        %v841 = vpop.f32.mrf.mxu0
        %v842 = vadd.f32 0.0, %v841
        %843 = vmatmul.bf16.gmra.mxu0 %v551
        %v844 = vpop.f32.mrf.mxu0
        %v845 = vadd.f32 0.0, %v844
        %v846 = vpop.f32.mrf.mxu0
        %v847 = vadd.f32 0.0, %v846
        %848 = vmatmul.bf16.gmra.mxu0 %v553
        %v849 = vpop.f32.mrf.mxu0
        %v850 = vadd.f32 0.0, %v849
        %v851 = vpop.f32.mrf.mxu0
        %v852 = vadd.f32 0.0, %v851
        %853 = vmatmul.bf16.gmra.mxu0 %v555
        %v854 = vpop.f32.mrf.mxu0
        %v855 = vadd.f32 0.0, %v854
        %v856 = vpop.f32.mrf.mxu0
        %v857 = vadd.f32 0.0, %v856
        %858 = vmatmul.bf16.gmra.mxu0 %v557
        %v859 = vpop.f32.mrf.mxu0
        %v860 = vadd.f32 0.0, %v859
        %v861 = vpop.f32.mrf.mxu0
        %v862 = vadd.f32 0.0, %v861
        %863 = vmatmul.bf16.gmra.mxu0 %v559
        %v864 = vpop.f32.mrf.mxu0
        %v865 = vadd.f32 0.0, %v864
        %v866 = vpop.f32.mrf.mxu0
        %v867 = vadd.f32 0.0, %v866
        %868 = vmatmul.bf16.gmra.mxu0 %v561
        %v869 = vpop.f32.mrf.mxu0
        %v870 = vadd.f32 0.0, %v869
        %v871 = vpop.f32.mrf.mxu0
        %v872 = vadd.f32 0.0, %v871
        %873 = vmatmul.bf16.gmra.mxu0 %v563
        %v874 = vpop.f32.mrf.mxu0
        %v875 = vadd.f32 0.0, %v874
        %v876 = vpop.f32.mrf.mxu0
        %v877 = vadd.f32 0.0, %v876
        %878 = vmatmul.bf16.gmra.mxu0 %v565
        %v879 = vpop.f32.mrf.mxu0
        %v880 = vadd.f32 0.0, %v879
        %v881 = vpop.f32.mrf.mxu0
        %v882 = vadd.f32 0.0, %v881
        %883 = vmatmul.bf16.gmra.mxu0 %v567
        %v884 = vpop.f32.mrf.mxu0
        %v885 = vadd.f32 0.0, %v884
        %v886 = vpop.f32.mrf.mxu0
        %v887 = vadd.f32 0.0, %v886
        %888 = vmatmul.bf16.gmra.mxu0 %v569
        %v889 = vpop.f32.mrf.mxu0
        %v890 = vadd.f32 0.0, %v889
        %v891 = vpop.f32.mrf.mxu0
        %v892 = vadd.f32 0.0, %v891
        %893 = vmatmul.bf16.gmra.mxu0 %v571
        %v894 = vpop.f32.mrf.mxu0
        %v895 = vadd.f32 0.0, %v894
        %v896 = vpop.f32.mrf.mxu0
        %v897 = vadd.f32 0.0, %v896
        %898 = vmatmul.bf16.gmra.mxu0 %v573
        %v899 = vpop.f32.mrf.mxu0
        %v900 = vadd.f32 0.0, %v899
        %v901 = vpop.f32.mrf.mxu0
        %v902 = vadd.f32 0.0, %v901
        %903 = vdwg.mxu0
        %904 = vmatpush.bf16.msra.mxu0 %v718
        %905 = vmatpush.bf16.msra.mxu0 %v717
        %906 = vmatpush.bf16.msra.mxu0 %v716
        %907 = vmatpush.bf16.msra.mxu0 %v715
        %908 = vmatpush.bf16.msra.mxu0 %v714
        %909 = vmatpush.bf16.msra.mxu0 %v713
        %910 = vmatpush.bf16.msra.mxu0 %v712
        %911 = vmatpush.bf16.msra.mxu0 %v711
        %912 = vmatmul.bf16.gmra.mxu0 %v512
        %v913 = vpop.f32.mrf.mxu0
        %v914 = vadd.f32 %v745, %v913
        %v915 = vpop.f32.mrf.mxu0
        %v916 = vadd.f32 %v747, %v915
        %917 = vmatmul.bf16.gmra.mxu0 %v514
        %v918 = vpop.f32.mrf.mxu0
        %v919 = vadd.f32 %v750, %v918
        %v920 = vpop.f32.mrf.mxu0
        %v921 = vadd.f32 %v752, %v920
        %922 = vmatmul.bf16.gmra.mxu0 %v516
        %v923 = vpop.f32.mrf.mxu0
        %v924 = vadd.f32 %v755, %v923
        %v925 = vpop.f32.mrf.mxu0
        %v926 = vadd.f32 %v757, %v925
        %927 = vmatmul.bf16.gmra.mxu0 %v518
        %v928 = vpop.f32.mrf.mxu0
        %v929 = vadd.f32 %v760, %v928
        %v930 = vpop.f32.mrf.mxu0
        %v931 = vadd.f32 %v762, %v930
        %932 = vmatmul.bf16.gmra.mxu0 %v520
        %v933 = vpop.f32.mrf.mxu0
        %v934 = vadd.f32 %v765, %v933
        %v935 = vpop.f32.mrf.mxu0
        %v936 = vadd.f32 %v767, %v935
        %937 = vmatmul.bf16.gmra.mxu0 %v522
        %v938 = vpop.f32.mrf.mxu0
        %v939 = vadd.f32 %v770, %v938
        %v940 = vpop.f32.mrf.mxu0
        %v941 = vadd.f32 %v772, %v940
        %942 = vmatmul.bf16.gmra.mxu0 %v524
        %v943 = vpop.f32.mrf.mxu0
        %v944 = vadd.f32 %v775, %v943
        %v945 = vpop.f32.mrf.mxu0
        %v946 = vadd.f32 %v777, %v945
        %947 = vmatmul.bf16.gmra.mxu0 %v526
        %v948 = vpop.f32.mrf.mxu0
        %v949 = vadd.f32 %v780, %v948
        %v950 = vpop.f32.mrf.mxu0
        %v951 = vadd.f32 %v782, %v950
        %952 = vmatmul.bf16.gmra.mxu0 %v528
        %v953 = vpop.f32.mrf.mxu0
        %v954 = vadd.f32 %v785, %v953
        %v955 = vpop.f32.mrf.mxu0
        %v956 = vadd.f32 %v787, %v955
        %957 = vmatmul.bf16.gmra.mxu0 %v530
        %v958 = vpop.f32.mrf.mxu0
        %v959 = vadd.f32 %v790, %v958
        %v960 = vpop.f32.mrf.mxu0
        %v961 = vadd.f32 %v792, %v960
        %962 = vmatmul.bf16.gmra.mxu0 %v532
        %v963 = vpop.f32.mrf.mxu0
        %v964 = vadd.f32 %v795, %v963
        %v965 = vpop.f32.mrf.mxu0
        %v966 = vadd.f32 %v797, %v965
        %967 = vmatmul.bf16.gmra.mxu0 %v534
        %v968 = vpop.f32.mrf.mxu0
        %v969 = vadd.f32 %v800, %v968
        %v970 = vpop.f32.mrf.mxu0
        %v971 = vadd.f32 %v802, %v970
        %972 = vmatmul.bf16.gmra.mxu0 %v536
        %v973 = vpop.f32.mrf.mxu0
        %v974 = vadd.f32 %v805, %v973
        %v975 = vpop.f32.mrf.mxu0
        %v976 = vadd.f32 %v807, %v975
        %977 = vmatmul.bf16.gmra.mxu0 %v538
        %v978 = vpop.f32.mrf.mxu0
        %v979 = vadd.f32 %v810, %v978
        %v980 = vpop.f32.mrf.mxu0
        %v981 = vadd.f32 %v812, %v980
        %982 = vmatmul.bf16.gmra.mxu0 %v540
        %v983 = vpop.f32.mrf.mxu0
        %v984 = vadd.f32 %v815, %v983
        %v985 = vpop.f32.mrf.mxu0
        %v986 = vadd.f32 %v817, %v985
        %987 = vmatmul.bf16.gmra.mxu0 %v542
        %v988 = vpop.f32.mrf.mxu0
        %v989 = vadd.f32 %v820, %v988
        %v990 = vpop.f32.mrf.mxu0
        %v991 = vadd.f32 %v822, %v990
        %992 = vmatmul.bf16.gmra.mxu0 %v544
        %v993 = vpop.f32.mrf.mxu0
        %v994 = vadd.f32 %v825, %v993
        %v995 = vpop.f32.mrf.mxu0
        %v996 = vadd.f32 %v827, %v995
        %997 = vmatmul.bf16.gmra.mxu0 %v546
        %v998 = vpop.f32.mrf.mxu0
        %v999 = vadd.f32 %v830, %v998
        %v1000 = vpop.f32.mrf.mxu0
        %v1001 = vadd.f32 %v832, %v1000
        %1002 = vmatmul.bf16.gmra.mxu0 %v548
        %v1003 = vpop.f32.mrf.mxu0
        %v1004 = vadd.f32 %v835, %v1003
        %v1005 = vpop.f32.mrf.mxu0
        %v1006 = vadd.f32 %v837, %v1005
        %1007 = vmatmul.bf16.gmra.mxu0 %v550
        %v1008 = vpop.f32.mrf.mxu0
        %v1009 = vadd.f32 %v840, %v1008
        %v1010 = vpop.f32.mrf.mxu0
        %v1011 = vadd.f32 %v842, %v1010
        %1012 = vmatmul.bf16.gmra.mxu0 %v552
        %v1013 = vpop.f32.mrf.mxu0
        %v1014 = vadd.f32 %v845, %v1013
        %v1015 = vpop.f32.mrf.mxu0
        %v1016 = vadd.f32 %v847, %v1015
        %1017 = vmatmul.bf16.gmra.mxu0 %v554
        %v1018 = vpop.f32.mrf.mxu0
        %v1019 = vadd.f32 %v850, %v1018
        %v1020 = vpop.f32.mrf.mxu0
        %v1021 = vadd.f32 %v852, %v1020
        %1022 = vmatmul.bf16.gmra.mxu0 %v556
        %v1023 = vpop.f32.mrf.mxu0
        %v1024 = vadd.f32 %v855, %v1023
        %v1025 = vpop.f32.mrf.mxu0
        %v1026 = vadd.f32 %v857, %v1025
        %1027 = vmatmul.bf16.gmra.mxu0 %v558
        %v1028 = vpop.f32.mrf.mxu0
        %v1029 = vadd.f32 %v860, %v1028
        %v1030 = vpop.f32.mrf.mxu0
        %v1031 = vadd.f32 %v862, %v1030
        %1032 = vmatmul.bf16.gmra.mxu0 %v560
        %v1033 = vpop.f32.mrf.mxu0
        %v1034 = vadd.f32 %v865, %v1033
        %v1035 = vpop.f32.mrf.mxu0
        %v1036 = vadd.f32 %v867, %v1035
        %1037 = vmatmul.bf16.gmra.mxu0 %v562
        %v1038 = vpop.f32.mrf.mxu0
        %v1039 = vadd.f32 %v870, %v1038
        %v1040 = vpop.f32.mrf.mxu0
        %v1041 = vadd.f32 %v872, %v1040
        %1042 = vmatmul.bf16.gmra.mxu0 %v564
        %v1043 = vpop.f32.mrf.mxu0
        %v1044 = vadd.f32 %v875, %v1043
        %v1045 = vpop.f32.mrf.mxu0
        %v1046 = vadd.f32 %v877, %v1045
        %1047 = vmatmul.bf16.gmra.mxu0 %v566
        %v1048 = vpop.f32.mrf.mxu0
        %v1049 = vadd.f32 %v880, %v1048
        %v1050 = vpop.f32.mrf.mxu0
        %v1051 = vadd.f32 %v882, %v1050
        %1052 = vmatmul.bf16.gmra.mxu0 %v568
        %v1053 = vpop.f32.mrf.mxu0
        %v1054 = vadd.f32 %v885, %v1053
        %v1055 = vpop.f32.mrf.mxu0
        %v1056 = vadd.f32 %v887, %v1055
        %1057 = vmatmul.bf16.gmra.mxu0 %v570
        %v1058 = vpop.f32.mrf.mxu0
        %v1059 = vadd.f32 %v890, %v1058
        %v1060 = vpop.f32.mrf.mxu0
        %v1061 = vadd.f32 %v892, %v1060
        %1062 = vmatmul.bf16.gmra.mxu0 %v572
        %v1063 = vpop.f32.mrf.mxu0
        %v1064 = vadd.f32 %v895, %v1063
        %v1065 = vpop.f32.mrf.mxu0
        %v1066 = vadd.f32 %v897, %v1065
        %1067 = vmatmul.bf16.gmra.mxu0 %v574
        %v1068 = vpop.f32.mrf.mxu0
        %v1069 = vadd.f32 %v900, %v1068
        %v1070 = vpop.f32.mrf.mxu0
        %v1071 = vadd.f32 %v902, %v1070
        %1072 = vdwg.mxu0
        %v1073 = vld [vmem:[%s2] sm:$0x1]
        %v1075 = vperm.slane %v1073, 0
        %v1077 = vmul.f32 %v914, %v1075
        %v1078 = vmul.f32 %v916, %v1075
        %v1079 = vmul.f32 %v919, %v1075
        %v1080 = vmul.f32 %v921, %v1075
        %v1081 = vmul.f32 %v924, %v1075
        %v1082 = vmul.f32 %v926, %v1075
        %v1083 = vmul.f32 %v929, %v1075
        %v1084 = vmul.f32 %v931, %v1075
        %v1085 = vmul.f32 %v934, %v1075
        %v1086 = vmul.f32 %v936, %v1075
        %v1087 = vmul.f32 %v939, %v1075
        %v1088 = vmul.f32 %v941, %v1075
        %v1089 = vmul.f32 %v944, %v1075
        %v1090 = vmul.f32 %v946, %v1075
        %v1091 = vmul.f32 %v949, %v1075
        %v1092 = vmul.f32 %v951, %v1075
        %v1093 = vmul.f32 %v954, %v1075
        %v1094 = vmul.f32 %v956, %v1075
        %v1095 = vmul.f32 %v959, %v1075
        %v1096 = vmul.f32 %v961, %v1075
        %v1097 = vmul.f32 %v964, %v1075
        %v1098 = vmul.f32 %v966, %v1075
        %v1099 = vmul.f32 %v969, %v1075
        %v1100 = vmul.f32 %v971, %v1075
        %v1101 = vmul.f32 %v974, %v1075
        %v1102 = vmul.f32 %v976, %v1075
        %v1103 = vmul.f32 %v979, %v1075
        %v1104 = vmul.f32 %v981, %v1075
        %v1105 = vmul.f32 %v984, %v1075
        %v1106 = vmul.f32 %v986, %v1075
        %v1107 = vmul.f32 %v989, %v1075
        %v1108 = vmul.f32 %v991, %v1075
        %v1109 = vmul.f32 %v994, %v1075
        %v1110 = vmul.f32 %v996, %v1075
        %v1111 = vmul.f32 %v999, %v1075
        %v1112 = vmul.f32 %v1001, %v1075
        %v1113 = vmul.f32 %v1004, %v1075
        %v1114 = vmul.f32 %v1006, %v1075
        %v1115 = vmul.f32 %v1009, %v1075
        %v1116 = vmul.f32 %v1011, %v1075
        %v1117 = vmul.f32 %v1014, %v1075
        %v1118 = vmul.f32 %v1016, %v1075
        %v1119 = vmul.f32 %v1019, %v1075
        %v1120 = vmul.f32 %v1021, %v1075
        %v1121 = vmul.f32 %v1024, %v1075
        %v1122 = vmul.f32 %v1026, %v1075
        %v1123 = vmul.f32 %v1029, %v1075
        %v1124 = vmul.f32 %v1031, %v1075
        %v1125 = vmul.f32 %v1034, %v1075
        %v1126 = vmul.f32 %v1036, %v1075
        %v1127 = vmul.f32 %v1039, %v1075
        %v1128 = vmul.f32 %v1041, %v1075
        %v1129 = vmul.f32 %v1044, %v1075
        %v1130 = vmul.f32 %v1046, %v1075
        %v1131 = vmul.f32 %v1049, %v1075
        %v1132 = vmul.f32 %v1051, %v1075
        %v1133 = vmul.f32 %v1054, %v1075
        %v1134 = vmul.f32 %v1056, %v1075
        %v1135 = vmul.f32 %v1059, %v1075
        %v1136 = vmul.f32 %v1061, %v1075
        %v1137 = vmul.f32 %v1064, %v1075
        %v1138 = vmul.f32 %v1066, %v1075
        %v1139 = vmul.f32 %v1069, %v1075
        %v1140 = vmul.f32 %v1071, %v1075
        %v1141 = vld [vmem:[%s3] sm:$0x1]
        %v1143 = vperm.slane %v1141, 0
        %v1145 = vadd.f32 %v1077, %v1143
        %v1146 = vadd.f32 %v1078, %v1143
        %v1147 = vadd.f32 %v1079, %v1143
        %v1148 = vadd.f32 %v1080, %v1143
        %v1149 = vadd.f32 %v1081, %v1143
        %v1150 = vadd.f32 %v1082, %v1143
        %v1151 = vadd.f32 %v1083, %v1143
        %v1152 = vadd.f32 %v1084, %v1143
        %v1153 = vadd.f32 %v1085, %v1143
        %v1154 = vadd.f32 %v1086, %v1143
        %v1155 = vadd.f32 %v1087, %v1143
        %v1156 = vadd.f32 %v1088, %v1143
        %v1157 = vadd.f32 %v1089, %v1143
        %v1158 = vadd.f32 %v1090, %v1143
        %v1159 = vadd.f32 %v1091, %v1143
        %v1160 = vadd.f32 %v1092, %v1143
        %v1161 = vadd.f32 %v1093, %v1143
        %v1162 = vadd.f32 %v1094, %v1143
        %v1163 = vadd.f32 %v1095, %v1143
        %v1164 = vadd.f32 %v1096, %v1143
        %v1165 = vadd.f32 %v1097, %v1143
        %v1166 = vadd.f32 %v1098, %v1143
        %v1167 = vadd.f32 %v1099, %v1143
        %v1168 = vadd.f32 %v1100, %v1143
        %v1169 = vadd.f32 %v1101, %v1143
        %v1170 = vadd.f32 %v1102, %v1143
        %v1171 = vadd.f32 %v1103, %v1143
        %v1172 = vadd.f32 %v1104, %v1143
        %v1173 = vadd.f32 %v1105, %v1143
        %v1174 = vadd.f32 %v1106, %v1143
        %v1175 = vadd.f32 %v1107, %v1143
        %v1176 = vadd.f32 %v1108, %v1143
        %v1177 = vadd.f32 %v1109, %v1143
        %v1178 = vadd.f32 %v1110, %v1143
        %v1179 = vadd.f32 %v1111, %v1143
        %v1180 = vadd.f32 %v1112, %v1143
        %v1181 = vadd.f32 %v1113, %v1143
        %v1182 = vadd.f32 %v1114, %v1143
        %v1183 = vadd.f32 %v1115, %v1143
        %v1184 = vadd.f32 %v1116, %v1143
        %v1185 = vadd.f32 %v1117, %v1143
        %v1186 = vadd.f32 %v1118, %v1143
        %v1187 = vadd.f32 %v1119, %v1143
        %v1188 = vadd.f32 %v1120, %v1143
        %v1189 = vadd.f32 %v1121, %v1143
        %v1190 = vadd.f32 %v1122, %v1143
        %v1191 = vadd.f32 %v1123, %v1143
        %v1192 = vadd.f32 %v1124, %v1143
        %v1193 = vadd.f32 %v1125, %v1143
        %v1194 = vadd.f32 %v1126, %v1143
        %v1195 = vadd.f32 %v1127, %v1143
        %v1196 = vadd.f32 %v1128, %v1143
        %v1197 = vadd.f32 %v1129, %v1143
        %v1198 = vadd.f32 %v1130, %v1143
        %v1199 = vadd.f32 %v1131, %v1143
        %v1200 = vadd.f32 %v1132, %v1143
        %v1201 = vadd.f32 %v1133, %v1143
        %v1202 = vadd.f32 %v1134, %v1143
        %v1203 = vadd.f32 %v1135, %v1143
        %v1204 = vadd.f32 %v1136, %v1143
        %v1205 = vadd.f32 %v1137, %v1143
        %v1206 = vadd.f32 %v1138, %v1143
        %v1207 = vadd.f32 %v1139, %v1143
        %v1208 = vadd.f32 %v1140, %v1143
        %v1209 = vmax.f32 %v1145, 0.0
        %v1210 = vmax.f32 %v1146, 0.0
        %v1211 = vmax.f32 %v1147, 0.0
        %v1212 = vmax.f32 %v1148, 0.0
        %v1213 = vmax.f32 %v1149, 0.0
        %v1214 = vmax.f32 %v1150, 0.0
        %v1215 = vmax.f32 %v1151, 0.0
        %v1216 = vmax.f32 %v1152, 0.0
        %v1217 = vmax.f32 %v1153, 0.0
        %v1218 = vmax.f32 %v1154, 0.0
        %v1219 = vmax.f32 %v1155, 0.0
        %v1220 = vmax.f32 %v1156, 0.0
        %v1221 = vmax.f32 %v1157, 0.0
        %v1222 = vmax.f32 %v1158, 0.0
        %v1223 = vmax.f32 %v1159, 0.0
        %v1224 = vmax.f32 %v1160, 0.0
        %v1225 = vmax.f32 %v1161, 0.0
        %v1226 = vmax.f32 %v1162, 0.0
        %v1227 = vmax.f32 %v1163, 0.0
        %v1228 = vmax.f32 %v1164, 0.0
        %v1229 = vmax.f32 %v1165, 0.0
        %v1230 = vmax.f32 %v1166, 0.0
        %v1231 = vmax.f32 %v1167, 0.0
        %v1232 = vmax.f32 %v1168, 0.0
        %v1233 = vmax.f32 %v1169, 0.0
        %v1234 = vmax.f32 %v1170, 0.0
        %v1235 = vmax.f32 %v1171, 0.0
        %v1236 = vmax.f32 %v1172, 0.0
        %v1237 = vmax.f32 %v1173, 0.0
        %v1238 = vmax.f32 %v1174, 0.0
        %v1239 = vmax.f32 %v1175, 0.0
        %v1240 = vmax.f32 %v1176, 0.0
        %v1241 = vmax.f32 %v1177, 0.0
        %v1242 = vmax.f32 %v1178, 0.0
        %v1243 = vmax.f32 %v1179, 0.0
        %v1244 = vmax.f32 %v1180, 0.0
        %v1245 = vmax.f32 %v1181, 0.0
        %v1246 = vmax.f32 %v1182, 0.0
        %v1247 = vmax.f32 %v1183, 0.0
        %v1248 = vmax.f32 %v1184, 0.0
        %v1249 = vmax.f32 %v1185, 0.0
        %v1250 = vmax.f32 %v1186, 0.0
        %v1251 = vmax.f32 %v1187, 0.0
        %v1252 = vmax.f32 %v1188, 0.0
        %v1253 = vmax.f32 %v1189, 0.0
        %v1254 = vmax.f32 %v1190, 0.0
        %v1255 = vmax.f32 %v1191, 0.0
        %v1256 = vmax.f32 %v1192, 0.0
        %v1257 = vmax.f32 %v1193, 0.0
        %v1258 = vmax.f32 %v1194, 0.0
        %v1259 = vmax.f32 %v1195, 0.0
        %v1260 = vmax.f32 %v1196, 0.0
        %v1261 = vmax.f32 %v1197, 0.0
        %v1262 = vmax.f32 %v1198, 0.0
        %v1263 = vmax.f32 %v1199, 0.0
        %v1264 = vmax.f32 %v1200, 0.0
        %v1265 = vmax.f32 %v1201, 0.0
        %v1266 = vmax.f32 %v1202, 0.0
        %v1267 = vmax.f32 %v1203, 0.0
        %v1268 = vmax.f32 %v1204, 0.0
        %v1269 = vmax.f32 %v1205, 0.0
        %v1270 = vmax.f32 %v1206, 0.0
        %v1271 = vmax.f32 %v1207, 0.0
        %v1272 = vmax.f32 %v1208, 0.0
        %v1273 = vpack.c.bf16 %v1209, %v1209
        %v1274 = vpack.c.bf16 %v1210, %v1210
        %v1275 = vpack.c.bf16 %v1211, %v1211
        %v1276 = vpack.c.bf16 %v1212, %v1212
        %v1277 = vpack.c.bf16 %v1213, %v1213
        %v1278 = vpack.c.bf16 %v1214, %v1214
        %v1279 = vpack.c.bf16 %v1215, %v1215
        %v1280 = vpack.c.bf16 %v1216, %v1216
        %v1281 = vpack.c.bf16 %v1217, %v1217
        %v1282 = vpack.c.bf16 %v1218, %v1218
        %v1283 = vpack.c.bf16 %v1219, %v1219
        %v1284 = vpack.c.bf16 %v1220, %v1220
        %v1285 = vpack.c.bf16 %v1221, %v1221
        %v1286 = vpack.c.bf16 %v1222, %v1222
        %v1287 = vpack.c.bf16 %v1223, %v1223
        %v1288 = vpack.c.bf16 %v1224, %v1224
        %v1289 = vpack.c.bf16 %v1225, %v1225
        %v1290 = vpack.c.bf16 %v1226, %v1226
        %v1291 = vpack.c.bf16 %v1227, %v1227
        %v1292 = vpack.c.bf16 %v1228, %v1228
        %v1293 = vpack.c.bf16 %v1229, %v1229
        %v1294 = vpack.c.bf16 %v1230, %v1230
        %v1295 = vpack.c.bf16 %v1231, %v1231
        %v1296 = vpack.c.bf16 %v1232, %v1232
        %v1297 = vpack.c.bf16 %v1233, %v1233
        %v1298 = vpack.c.bf16 %v1234, %v1234
        %v1299 = vpack.c.bf16 %v1235, %v1235
        %v1300 = vpack.c.bf16 %v1236, %v1236
        %v1301 = vpack.c.bf16 %v1237, %v1237
        %v1302 = vpack.c.bf16 %v1238, %v1238
        %v1303 = vpack.c.bf16 %v1239, %v1239
        %v1304 = vpack.c.bf16 %v1240, %v1240
        %v1305 = vpack.c.bf16 %v1241, %v1241
        %v1306 = vpack.c.bf16 %v1242, %v1242
        %v1307 = vpack.c.bf16 %v1243, %v1243
        %v1308 = vpack.c.bf16 %v1244, %v1244
        %v1309 = vpack.c.bf16 %v1245, %v1245
        %v1310 = vpack.c.bf16 %v1246, %v1246
        %v1311 = vpack.c.bf16 %v1247, %v1247
        %v1312 = vpack.c.bf16 %v1248, %v1248
        %v1313 = vpack.c.bf16 %v1249, %v1249
        %v1314 = vpack.c.bf16 %v1250, %v1250
        %v1315 = vpack.c.bf16 %v1251, %v1251
        %v1316 = vpack.c.bf16 %v1252, %v1252
        %v1317 = vpack.c.bf16 %v1253, %v1253
        %v1318 = vpack.c.bf16 %v1254, %v1254
        %v1319 = vpack.c.bf16 %v1255, %v1255
        %v1320 = vpack.c.bf16 %v1256, %v1256
        %v1321 = vpack.c.bf16 %v1257, %v1257
        %v1322 = vpack.c.bf16 %v1258, %v1258
        %v1323 = vpack.c.bf16 %v1259, %v1259
        %v1324 = vpack.c.bf16 %v1260, %v1260
        %v1325 = vpack.c.bf16 %v1261, %v1261
        %v1326 = vpack.c.bf16 %v1262, %v1262
        %v1327 = vpack.c.bf16 %v1263, %v1263
        %v1328 = vpack.c.bf16 %v1264, %v1264
        %v1329 = vpack.c.bf16 %v1265, %v1265
        %v1330 = vpack.c.bf16 %v1266, %v1266
        %v1331 = vpack.c.bf16 %v1267, %v1267
        %v1332 = vpack.c.bf16 %v1268, %v1268
        %v1333 = vpack.c.bf16 %v1269, %v1269
        %v1334 = vpack.c.bf16 %v1270, %v1270
        %v1335 = vpack.c.bf16 %v1271, %v1271
        %v1336 = vpack.c.bf16 %v1272, %v1272
        %vm1337 = vcmask 519168
        %1338 = vst.msk [vmem:[%s221] sm:$0xf] %vm1337, %v1273
        %1339 = vst.msk [vmem:[%s221 + $0x4] sm:$0xf] %vm1337, %v1274
        %1340 = vst.msk [vmem:[%s221 + $0x8] sm:$0xf] %vm1337, %v1275
        %1341 = vst.msk [vmem:[%s221 + $0xc] sm:$0xf] %vm1337, %v1276
        %1342 = vst.msk [vmem:[%s221 + $0x10] sm:$0xf] %vm1337, %v1277
        %1343 = vst.msk [vmem:[%s221 + $0x14] sm:$0xf] %vm1337, %v1278
        %1344 = vst.msk [vmem:[%s221 + $0x18] sm:$0xf] %vm1337, %v1279
        %1345 = vst.msk [vmem:[%s221 + $0x1c] sm:$0xf] %vm1337, %v1280
        %1346 = vst.msk [vmem:[%s221 + $0x20] sm:$0xf] %vm1337, %v1281
        %1347 = vst.msk [vmem:[%s221 + $0x24] sm:$0xf] %vm1337, %v1282
        %1348 = vst.msk [vmem:[%s221 + $0x28] sm:$0xf] %vm1337, %v1283
        %1349 = vst.msk [vmem:[%s221 + $0x2c] sm:$0xf] %vm1337, %v1284
        %1350 = vst.msk [vmem:[%s221 + $0x30] sm:$0xf] %vm1337, %v1285
        %1351 = vst.msk [vmem:[%s221 + $0x34] sm:$0xf] %vm1337, %v1286
        %1352 = vst.msk [vmem:[%s221 + $0x38] sm:$0xf] %vm1337, %v1287
        %1353 = vst.msk [vmem:[%s221 + $0x3c] sm:$0xf] %vm1337, %v1288
        %1354 = vst.msk [vmem:[%s221 + $0x40] sm:$0xf] %vm1337, %v1289
        %1355 = vst.msk [vmem:[%s221 + $0x44] sm:$0xf] %vm1337, %v1290
        %1356 = vst.msk [vmem:[%s221 + $0x48] sm:$0xf] %vm1337, %v1291
        %1357 = vst.msk [vmem:[%s221 + $0x4c] sm:$0xf] %vm1337, %v1292
        %1358 = vst.msk [vmem:[%s221 + $0x50] sm:$0xf] %vm1337, %v1293
        %1359 = vst.msk [vmem:[%s221 + $0x54] sm:$0xf] %vm1337, %v1294
        %1360 = vst.msk [vmem:[%s221 + $0x58] sm:$0xf] %vm1337, %v1295
        %1361 = vst.msk [vmem:[%s221 + $0x5c] sm:$0xf] %vm1337, %v1296
        %1362 = vst.msk [vmem:[%s221 + $0x60] sm:$0xf] %vm1337, %v1297
        %1363 = vst.msk [vmem:[%s221 + $0x64] sm:$0xf] %vm1337, %v1298
        %1364 = vst.msk [vmem:[%s221 + $0x68] sm:$0xf] %vm1337, %v1299
        %1365 = vst.msk [vmem:[%s221 + $0x6c] sm:$0xf] %vm1337, %v1300
        %1366 = vst.msk [vmem:[%s221 + $0x70] sm:$0xf] %vm1337, %v1301
        %1367 = vst.msk [vmem:[%s221 + $0x74] sm:$0xf] %vm1337, %v1302
        %1368 = vst.msk [vmem:[%s221 + $0x78] sm:$0xf] %vm1337, %v1303
        %1369 = vst.msk [vmem:[%s221 + $0x7c] sm:$0xf] %vm1337, %v1304
        %1370 = vst.msk [vmem:[%s221 + $0x80] sm:$0xf] %vm1337, %v1305
        %1371 = vst.msk [vmem:[%s221 + $0x84] sm:$0xf] %vm1337, %v1306
        %1372 = vst.msk [vmem:[%s221 + $0x88] sm:$0xf] %vm1337, %v1307
        %1373 = vst.msk [vmem:[%s221 + $0x8c] sm:$0xf] %vm1337, %v1308
        %1374 = vst.msk [vmem:[%s221 + $0x90] sm:$0xf] %vm1337, %v1309
        %1375 = vst.msk [vmem:[%s221 + $0x94] sm:$0xf] %vm1337, %v1310
        %1376 = vst.msk [vmem:[%s221 + $0x98] sm:$0xf] %vm1337, %v1311
        %1377 = vst.msk [vmem:[%s221 + $0x9c] sm:$0xf] %vm1337, %v1312
        %1378 = vst.msk [vmem:[%s221 + $0xa0] sm:$0xf] %vm1337, %v1313
        %1379 = vst.msk [vmem:[%s221 + $0xa4] sm:$0xf] %vm1337, %v1314
        %1380 = vst.msk [vmem:[%s221 + $0xa8] sm:$0xf] %vm1337, %v1315
        %1381 = vst.msk [vmem:[%s221 + $0xac] sm:$0xf] %vm1337, %v1316
        %1382 = vst.msk [vmem:[%s221 + $0xb0] sm:$0xf] %vm1337, %v1317
        %1383 = vst.msk [vmem:[%s221 + $0xb4] sm:$0xf] %vm1337, %v1318
        %1384 = vst.msk [vmem:[%s221 + $0xb8] sm:$0xf] %vm1337, %v1319
        %1385 = vst.msk [vmem:[%s221 + $0xbc] sm:$0xf] %vm1337, %v1320
        %1386 = vst.msk [vmem:[%s221 + $0xc0] sm:$0xf] %vm1337, %v1321
        %1387 = vst.msk [vmem:[%s221 + $0xc4] sm:$0xf] %vm1337, %v1322
        %1388 = vst.msk [vmem:[%s221 + $0xc8] sm:$0xf] %vm1337, %v1323
        %1389 = vst.msk [vmem:[%s221 + $0xcc] sm:$0xf] %vm1337, %v1324
        %1390 = vst.msk [vmem:[%s221 + $0xd0] sm:$0xf] %vm1337, %v1325
        %1391 = vst.msk [vmem:[%s221 + $0xd4] sm:$0xf] %vm1337, %v1326
        %1392 = vst.msk [vmem:[%s221 + $0xd8] sm:$0xf] %vm1337, %v1327
        %1393 = vst.msk [vmem:[%s221 + $0xdc] sm:$0xf] %vm1337, %v1328
        %1394 = vst.msk [vmem:[%s221 + $0xe0] sm:$0xf] %vm1337, %v1329
        %1395 = vst.msk [vmem:[%s221 + $0xe4] sm:$0xf] %vm1337, %v1330
        %1396 = vst.msk [vmem:[%s221 + $0xe8] sm:$0xf] %vm1337, %v1331
        %1397 = vst.msk [vmem:[%s221 + $0xec] sm:$0xf] %vm1337, %v1332
        %1398 = vst.msk [vmem:[%s221 + $0xf0] sm:$0xf] %vm1337, %v1333
        %1399 = vst.msk [vmem:[%s221 + $0xf4] sm:$0xf] %vm1337, %v1334
        %1400 = vst.msk [vmem:[%s221 + $0xf8] sm:$0xf] %vm1337, %v1335
        %1401 = vst.msk [vmem:[%s221 + $0xfc] sm:$0xf] %vm1337, %v1336
        %s1402 = smul.u32 64, %s18
        %p1403 = scmp.lt.s32.totalorder %s1402, 191
        %s1404 = scalar_select %p1403, %s1402, 191
        %s1405 = smul.addr %s1404, 4
        %s1406 = scalar_lea.vmem %s4, %s1405
        // Predicated region
        $region41: #{tpu_custom_call.1} parent=35 // pred_check
          %p1407 = pneg %p125
        $region42: #{tpu_custom_call.1} parent=35 // pred_check_branch
          %1409 = sbr.rel (%p1407) target = $region44
        $region43: #{tpu_custom_call.1} parent=35 // pred_region
          %s1410 = smul.u32 64, %s18
        $region44: #{tpu_custom_call.1} parent=35 // pred_fallthru
          _
      $region36: #{tpu_custom_call.1} parent=5 // pred_fallthru
        _
      %p1411 = scmp.le.s32.totalorder 2, %s13
      // Predicated region
      $region45: #{tpu_custom_call.1} parent=5 // pred_check
        %p1412 = pneg %p1411
      $region46: #{tpu_custom_call.1} parent=5 // pred_check_branch
        %1414 = sbr.rel (%p1412) target = $region48
      $region47: #{tpu_custom_call.1} parent=5 // pred_region
        %s1415 = ssub.s32 %s13, 2
        // Predicated region
        $region49: #{tpu_custom_call.1} parent=47 // pred_check
          %p1416 = pneg %p131
        $region50: #{tpu_custom_call.1} parent=47 // pred_check_branch
          %1418 = sbr.rel (%p1416) target = $region52
        $region51: #{tpu_custom_call.1} parent=47 // pred_region
          %s1419 = smul.u32 64, %s19
          %p1420 = scmp.lt.s32.totalorder %s1419, 191
          %s1421 = scalar_select %p1420, %s1419, 191
          %s1422 = smul.addr %s1421, 4
          %s1423 = scalar_lea.vmem %s4, %s1422
        $region52: #{tpu_custom_call.1} parent=47 // pred_fallthru
          _
      $region48: #{tpu_custom_call.1} parent=5 // pred_fallthru
        _
    $region6: #{tpu_custom_call.1} parent=1 // loop_footer
      %s17 = sadd.s32 1, %s13
    $region7: #{tpu_custom_call.1} parent=1 // loop_footer_branch
      %12 = sbr.rel target = $region3
    $region8: #{tpu_custom_call.1} parent=1 // loop_exit
      _
    %1424 = vsyncpa [#allocation3], 1
    %s1425 = scalar_lea.sflag [#allocation3], 1
    %1426 = vsyncpa %s1425, 1

</llo_original>
